<compile_context>
chip_gen: v5e
topology: v5e:2x2
jax: 0.10.0
libtpu: 0.0.40
codegen_flags: <defaults>
</compile_context>

<pallas_src>
import functools

import jax
import jax.numpy as jnp
from jax import lax
from jax.experimental import pallas as pl
from jax.experimental.pallas import tpu as pltpu


def _readout_kernel(v0_ref, v1_ref, w0_ref, w1_ref, b_ref, o_ref, acc_ref, *,
                    tiles_per_split, n_row_blocks, rows_in_edge_block, tile_n):
    s = pl.program_id(0)          # parallel split (maps across TensorCores on v7x)
    t = pl.program_id(1)          # streaming reduction tile within the split
    row_block = s * tiles_per_split + t

    @pl.when(t == 0)
    def _():
        acc_ref[...] = jnp.zeros_like(acc_ref)

    def compute_tile():
        # cat([v0, v1], 1) @ W.T  ==  v0 @ W[:, :D].T + v1 @ W[:, D:].T
        # bf16 operands -> single-pass MXU; accumulate + bias + ReLU in f32.
        x0 = v0_ref[...].astype(jnp.bfloat16)
        x1 = v1_ref[...].astype(jnp.bfloat16)
        y = jnp.dot(x0, w0_ref[...], preferred_element_type=jnp.float32)
        y = y + jnp.dot(x1, w1_ref[...], preferred_element_type=jnp.float32)
        return jnp.maximum(y + b_ref[...], 0.0)

    def accumulate(y):
        # Tree-add rows down to 8 sublanes: pure VALU vreg adds into an aligned
        # (8, 2D) scratch; the cross-sublane XLU reduce happens once per split.
        acc_ref[...] += jnp.sum(y.reshape(tile_n // 8, 8, y.shape[1]), axis=0)

    if rows_in_edge_block == tile_n:
        # No padded rows anywhere; only skip (clamped) out-of-range grid steps.
        @pl.when(row_block < n_row_blocks)
        def _():
            accumulate(compute_tile())
    else:
        @pl.when(row_block < n_row_blocks - 1)
        def _():
            accumulate(compute_tile())

        # Only the single trailing block pays iota/compare/select; padded rows are
        # zeroed BEFORE the row sum (relu(pad @ W + b) may be nonzero / NaN).
        @pl.when(row_block == n_row_blocks - 1)
        def _():
            y = compute_tile()
            rows = lax.broadcasted_iota(jnp.int32, y.shape, 0)
            accumulate(jnp.where(rows < rows_in_edge_block, y, 0.0))

    @pl.when(t == tiles_per_split - 1)
    def _():
        o_ref[0] = jnp.sum(acc_ref[...], axis=0, keepdims=True)


def prepare_readout_params(weight, bias):
    """Once-per-model param prep (hoisted out of the forward).

    torch Linear weight is (out, in) = (2D, 2D).  The in-kernel concat is removed by
    splitting the contraction: cat([v0,v1],1) @ W.T == v0 @ W[:, :D].T + v1 @ W[:, D:].T.
    Weights are stored bf16 (single-pass MXU); bias stays f32.
    """
    two_d = weight.shape[0]
    d = two_d // 2
    w = jnp.asarray(weight, jnp.float32)
    w0_t = w[:, :d].T.astype(jnp.bfloat16)               # (D, 2D)
    w1_t = w[:, d:].T.astype(jnp.bfloat16)               # (D, 2D)
    b = jnp.asarray(bias, jnp.float32).reshape(1, two_d)  # (1, 2D)
    return w0_t, w1_t, b


def readout_layer(v0, v1, w0_t, w1_t, b, *, tile_n=2048):
    """v0, v1: (N, D) f32 (or bf16).  w0_t/w1_t: (D, 2D) bf16.  b: (1, 2D) f32."""
    n, d = v0.shape
    two_d = 2 * d
    assert v1.shape == (n, d)
    assert w0_t.shape == (d, two_d) and w1_t.shape == (d, two_d)
    assert b.shape == (1, two_d)

    # 8-row-aligned tile, clamped to the (8-padded) problem size.
    tile_n = max(8, (min(int(tile_n), -(-n // 8) * 8) // 8) * 8)

    n_row_blocks = pl.cdiv(n, tile_n)
    # Split the N reduction across both TensorCores (v7x) when there is enough work.
    num_splits = 2 if n_row_blocks >= 2 else 1
    tiles_per_split = pl.cdiv(n_row_blocks, num_splits)
    has_oob_steps = num_splits * tiles_per_split > n_row_blocks
    rows_in_edge_block = n - (n_row_blocks - 1) * tile_n   # real rows of last block

    def row_map(s, t):
        idx = s * tiles_per_split + t
        if has_oob_steps:
            # Fully out-of-range steps re-read the last real block (OOB-DMA guard);
            # the in-kernel predicate skips their compute entirely.
            idx = jnp.minimum(idx, n_row_blocks - 1)
        return (idx, 0)

    kernel = functools.partial(
        _readout_kernel,
        tiles_per_split=tiles_per_split, n_row_blocks=n_row_blocks,
        rows_in_edge_block=rows_in_edge_block, tile_n=tile_n)

    partials = pl.pallas_call(
        kernel,
        out_shape=jax.ShapeDtypeStruct((num_splits, 1, two_d), jnp.float32),
        grid=(num_splits, tiles_per_split),
        in_specs=[
            pl.BlockSpec((tile_n, d), row_map),                 # v0 (streamed)
            pl.BlockSpec((tile_n, d), row_map),                 # v1 (streamed)
            pl.BlockSpec((d, two_d), lambda s, t: (0, 0)),      # W[:, :D].T (resident)
            pl.BlockSpec((d, two_d), lambda s, t: (0, 0)),      # W[:, D:].T (resident)
            pl.BlockSpec((1, two_d), lambda s, t: (0, 0)),      # bias (resident)
        ],
        out_specs=pl.BlockSpec((1, 1, two_d), lambda s, t: (s, 0, 0)),
        scratch_shapes=[pltpu.VMEM((8, two_d), jnp.float32)],
        compiler_params=pltpu.CompilerParams(
            dimension_semantics=("parallel", "arbitrary")),
    )(v0, v1, w0_t, w1_t, b)

    # Cross-split partial sum: one tiny XLA add outside the kernel.
    return jnp.sum(partials, axis=0)                            # (1, 2D)


if __name__ == "__main__":
    node_dim = 32          # D
    edge_dim = 16          # unused by forward (kept for parity with torch __init__)
    mem_dim = 16           # unused by forward
    n_nodes = 8            # rows in v0 / v1

    key = jax.random.PRNGKey(0)
    k0, k1, kw, kb = jax.random.split(key, 4)

    v0 = jax.random.normal(k0, (n_nodes, node_dim), dtype=jnp.float32)
    v1 = jax.random.normal(k1, (n_nodes, node_dim), dtype=jnp.float32)

    # Deterministic init for nn.Linear(2*node_dim, 2*node_dim): weight (out, in), bias (out,)
    two_d = 2 * node_dim
    bound = 1.0 / jnp.sqrt(jnp.float32(two_d))
    weight = jax.random.uniform(kw, (two_d, two_d), minval=-bound, maxval=bound,
                                dtype=jnp.float32)
    bias = jax.random.uniform(kb, (two_d,), minval=-bound, maxval=bound,
                              dtype=jnp.float32)

    # Hoisted once (not per forward call).
    w0_t, w1_t, b = prepare_readout_params(weight, bias)

    def ref_fn(a0, a1):
        # Pure-JAX f32 reference of the PyTorch forward pass.
        catted = jnp.concatenate([a0, a1], axis=1)
        y = jnp.dot(catted, weight.T, precision=lax.Precision.HIGHEST) + bias
        return jnp.maximum(y, 0.0).sum(axis=0, keepdims=True)

    # Small case: single tile, single split.  bf16 MXU operands -> loosened tolerance.
    out = jax.block_until_ready(readout_layer(v0, v1, w0_t, w1_t, b))
    ref = ref_fn(v0, v1)
    assert out.shape == (1, two_d)
    assert jnp.allclose(out, ref, atol=1e-1, rtol=5e-2), (out, ref)

    # Multi-tile, two parallel splits, masked trailing partial tile
    # (N=2000, tile_n=512 -> grid=(2, 2); edge block has 464 real rows).
    kb0, kb1 = jax.random.split(jax.random.PRNGKey(1), 2)
    v0b = jax.random.normal(kb0, (2000, node_dim), dtype=jnp.float32)
    v1b = jax.random.normal(kb1, (2000, node_dim), dtype=jnp.float32)
    out_b = jax.block_until_ready(readout_layer(v0b, v1b, w0_t, w1_t, b, tile_n=512))
    ref_b = ref_fn(v0b, v1b)
    assert out_b.shape == (1, two_d)
    assert jnp.allclose(out_b, ref_b, atol=2.0, rtol=2e-2), (out_b, ref_b)

    # Uneven block count: clamped out-of-range grid step is skipped by the predicate
    # (N=1200, tile_n=512 -> 3 row blocks over a (2, 2) grid, edge block has 176 rows).
    kc0, kc1 = jax.random.split(jax.random.PRNGKey(2), 2)
    v0c = jax.random.normal(kc0, (1200, node_dim), dtype=jnp.float32)
    v1c = jax.random.normal(kc1, (1200, node_dim), dtype=jnp.float32)
    out_c = jax.block_until_ready(readout_layer(v0c, v1c, w0_t, w1_t, b, tile_n=512))
    ref_c = ref_fn(v0c, v1c)
    assert jnp.allclose(out_c, ref_c, atol=2.0, rtol=2e-2), (out_c, ref_c)

    print("KERNEL_OK")
</pallas_src>

<mosaic_0001>
module attributes {stable_mosaic.version = 11 : i64} {
  func.func @_readout_kernel(%arg0: i32, %arg1: i32, %arg2: memref<8x32xf32, #tpu.memory_space<vmem>>, %arg3: memref<8x32xf32, #tpu.memory_space<vmem>>, %arg4: memref<32x64xbf16, #tpu.memory_space<vmem>>, %arg5: memref<32x64xbf16, #tpu.memory_space<vmem>>, %arg6: memref<1x64xf32, #tpu.memory_space<vmem>>, %arg7: memref<1x1x64xf32, #tpu.memory_space<vmem>>, %arg8: memref<8x64xf32, #tpu.memory_space<vmem>>) attributes {dimension_semantics = [#tpu.dimension_semantics<parallel>, #tpu.dimension_semantics<arbitrary>], iteration_bounds = array<i64: 1, 1>, scalar_prefetch = 0 : i64, scratch_operands = 1 : i64, tpu.core_type = #tpu.core_type<tc>, window_params = [{transform_indices = @transform_0, window_bounds = array<i64: 8, 32>}, {transform_indices = @transform_1, window_bounds = array<i64: 8, 32>}, {pipeline_mode = #tpu.pipeline_mode<synchronous>, transform_indices = @transform_2, window_bounds = array<i64: 32, 64>}, {pipeline_mode = #tpu.pipeline_mode<synchronous>, transform_indices = @transform_3, window_bounds = array<i64: 32, 64>}, {pipeline_mode = #tpu.pipeline_mode<synchronous>, transform_indices = @transform_4, window_bounds = array<i64: 1, 64>}, {transform_indices = @transform_5, window_bounds = array<i64: 1, 1, 64>}]} {
    %c1_i32 = arith.constant 1 : i32
    %0 = arith.muli %arg0, %c1_i32 : i32
    %1 = arith.addi %0, %arg1 : i32
    %c0_i32 = arith.constant 0 : i32
    %2 = arith.cmpi eq, %arg1, %c0_i32 : i32
    %3 = arith.extui %2 : i1 to i32
    %c0_i32_0 = arith.constant 0 : i32
    %4 = arith.cmpi ne, %3, %c0_i32_0 : i32
    scf.if %4 {
      %cst = arith.constant 0.000000e+00 : f32
      %11 = vector.broadcast %cst : f32 to vector<8x64xf32>
      %c0 = arith.constant 0 : index
      %c0_5 = arith.constant 0 : index
      %12 = vector.load %arg8[%c0, %c0_5] : memref<8x64xf32, #tpu.memory_space<vmem>>, vector<8x64xf32>
      tpu.vector_store %arg8[%c0, %c0_5], %11 {strides = array<i32>} : memref<8x64xf32, #tpu.memory_space<vmem>>, vector<8x64xf32>,
    } else {
    }
    %c1_i32_1 = arith.constant 1 : i32
    %5 = arith.cmpi slt, %1, %c1_i32_1 : i32
    %6 = arith.extui %5 : i1 to i32
    %c0_i32_2 = arith.constant 0 : i32
    %7 = arith.cmpi ne, %6, %c0_i32_2 : i32
    scf.if %7 {
      %c0 = arith.constant 0 : index
      %c0_5 = arith.constant 0 : index
      %11 = vector.load %arg2[%c0, %c0_5] : memref<8x32xf32, #tpu.memory_space<vmem>>, vector<8x32xf32>
      %12 = arith.truncf %11 : vector<8x32xf32> to vector<8x32xbf16>
      %c0_6 = arith.constant 0 : index
      %c0_7 = arith.constant 0 : index
      %13 = vector.load %arg3[%c0_6, %c0_7] : memref<8x32xf32, #tpu.memory_space<vmem>>, vector<8x32xf32>
      %14 = arith.truncf %13 : vector<8x32xf32> to vector<8x32xbf16>
      %c0_8 = arith.constant 0 : index
      %c0_9 = arith.constant 0 : index
      %15 = vector.load %arg4[%c0_8, %c0_9] : memref<32x64xbf16, #tpu.memory_space<vmem>>, vector<32x64xbf16>
      %cst = arith.constant dense<0.000000e+00> : vector<8x64xf32>
      %16 = tpu.matmul %12, %15, %cst {dimension_numbers = #tpu.dot_dimension_numbers<[1], [0], [0], [1], [0, 0, 1, 1], [], []>} : vector<8x32xbf16>, vector<32x64xbf16>, vector<8x64xf32> -> vector<8x64xf32>
      %c0_10 = arith.constant 0 : index
      %c0_11 = arith.constant 0 : index
      %17 = vector.load %arg5[%c0_10, %c0_11] : memref<32x64xbf16, #tpu.memory_space<vmem>>, vector<32x64xbf16>
      %cst_12 = arith.constant dense<0.000000e+00> : vector<8x64xf32>
      %18 = tpu.matmul %14, %17, %cst_12 {dimension_numbers = #tpu.dot_dimension_numbers<[1], [0], [0], [1], [0, 0, 1, 1], [], []>} : vector<8x32xbf16>, vector<32x64xbf16>, vector<8x64xf32> -> vector<8x64xf32>
      %19 = arith.addf %16, %18 : vector<8x64xf32>
      %c0_13 = arith.constant 0 : index
      %c0_14 = arith.constant 0 : index
      %20 = vector.load %arg6[%c0_13, %c0_14] : memref<1x64xf32, #tpu.memory_space<vmem>>, vector<1x64xf32>
      %21 = vector.broadcast %20 : vector<1x64xf32> to vector<8x64xf32>
      %22 = arith.addf %19, %21 : vector<8x64xf32>
      %cst_15 = arith.constant 0.000000e+00 : f32
      %23 = vector.broadcast %cst_15 : f32 to vector<8x64xf32>
      %24 = arith.maximumf %22, %23 : vector<8x64xf32>
      %c0_16 = arith.constant 0 : index
      %c0_17 = arith.constant 0 : index
      %25 = vector.load %arg8[%c0_16, %c0_17] : memref<8x64xf32, #tpu.memory_space<vmem>>, vector<8x64xf32>
      %26 = vector.shape_cast %24 : vector<8x64xf32> to vector<1x8x64xf32>
      %cst_18 = arith.constant dense<0.000000e+00> : vector<8x64xf32>
      %27 = vector.multi_reduction <add>, %26, %cst_18 [0] : vector<1x8x64xf32> to vector<8x64xf32>
      %28 = arith.addf %25, %27 : vector<8x64xf32>
      %c0_19 = arith.constant 0 : index
      %c0_20 = arith.constant 0 : index
      %29 = vector.load %arg8[%c0_19, %c0_20] : memref<8x64xf32, #tpu.memory_space<vmem>>, vector<8x64xf32>
      tpu.vector_store %arg8[%c0_19, %c0_20], %28 {strides = array<i32>} : memref<8x64xf32, #tpu.memory_space<vmem>>, vector<8x64xf32>,
    } else {
    }
    %c0_i32_3 = arith.constant 0 : i32
    %8 = arith.cmpi eq, %arg1, %c0_i32_3 : i32
    %9 = arith.extui %8 : i1 to i32
    %c0_i32_4 = arith.constant 0 : i32
    %10 = arith.cmpi ne, %9, %c0_i32_4 : i32
    scf.if %10 {
      %c0 = arith.constant 0 : index
      %c0_5 = arith.constant 0 : index
      %11 = vector.load %arg8[%c0, %c0_5] : memref<8x64xf32, #tpu.memory_space<vmem>>, vector<8x64xf32>
      %cst = arith.constant dense<0.000000e+00> : vector<64xf32>
      %12 = vector.multi_reduction <add>, %11, %cst [0] : vector<8x64xf32> to vector<64xf32>
      %13 = vector.shape_cast %12 : vector<64xf32> to vector<1x64xf32>
      %c0_6 = arith.constant 0 : index
      %c0_7 = arith.constant 0 : index
      %c0_8 = arith.constant 0 : index
      %14 = vector.load %arg7[%c0_6, %c0_7, %c0_8] : memref<1x1x64xf32, #tpu.memory_space<vmem>>, vector<1x1x64xf32>
      %15 = vector.shape_cast %14 : vector<1x1x64xf32> to vector<1x64xf32>
      %16 = vector.shape_cast %13 : vector<1x64xf32> to vector<1x1x64xf32>
      tpu.vector_store %arg7[%c0_6, %c0_7, %c0_8], %16 {strides = array<i32>} : memref<1x1x64xf32, #tpu.memory_space<vmem>>, vector<1x1x64xf32>,
    } else {
    }
    return
  }
  func.func @transform_0(%arg0: i32, %arg1: i32) -> (i32, i32) {
    %c1_i32 = arith.constant 1 : i32
    %0 = arith.muli %arg0, %c1_i32 : i32
    %1 = arith.addi %0, %arg1 : i32
    %c0_i32 = arith.constant 0 : i32
    %c0_i32_0 = arith.constant 0 : i32
    return %1, %c0_i32 : i32, i32
  }
  func.func @transform_1(%arg0: i32, %arg1: i32) -> (i32, i32) {
    %c1_i32 = arith.constant 1 : i32
    %0 = arith.muli %arg0, %c1_i32 : i32
    %1 = arith.addi %0, %arg1 : i32
    %c0_i32 = arith.constant 0 : i32
    %c0_i32_0 = arith.constant 0 : i32
    return %1, %c0_i32 : i32, i32
  }
  func.func @transform_2(%arg0: i32, %arg1: i32) -> (i32, i32) {
    %c0_i32 = arith.constant 0 : i32
    %c0_i32_0 = arith.constant 0 : i32
    %c0_i32_1 = arith.constant 0 : i32
    return %c0_i32, %c0_i32_0 : i32, i32
  }
  func.func @transform_3(%arg0: i32, %arg1: i32) -> (i32, i32) {
    %c0_i32 = arith.constant 0 : i32
    %c0_i32_0 = arith.constant 0 : i32
    %c0_i32_1 = arith.constant 0 : i32
    return %c0_i32, %c0_i32_0 : i32, i32
  }
  func.func @transform_4(%arg0: i32, %arg1: i32) -> (i32, i32) {
    %c0_i32 = arith.constant 0 : i32
    %c0_i32_0 = arith.constant 0 : i32
    %c0_i32_1 = arith.constant 0 : i32
    return %c0_i32, %c0_i32_0 : i32, i32
  }
  func.func @transform_5(%arg0: i32, %arg1: i32) -> (i32, i32, i32) {
    %c0_i32 = arith.constant 0 : i32
    %c0_i32_0 = arith.constant 0 : i32
    %c0_i32_1 = arith.constant 0 : i32
    return %arg0, %c0_i32, %c0_i32_0 : i32, i32, i32
  }
}

</mosaic_0001>

<llo_original>
// kernel: tpu_custom_call.1
$region0: #{tpu_custom_call.1}
  #allocation0 [shape = 'u32[]', space=smem, size = 0x4, offset = 0x4, fixed_abs, tag = 'smem constant byte address 0x4 - core index']
  #allocation1 [shape = 'u32[72,128]{1,0:T(1,128)}', space=vmem, size = 0x9000, scoped, tag = 'internal scratch']
  #allocation2 [shape = 'f32[8,64]{1,0:T(8,128)}', space=vmem, size = 0x1000, scoped, tag = 'scratch operand']
  %s0 = inlined_call_operand.hbm [shape: f32[8,32], index: 0, kind: input, shape index: {}]
  %s1 = inlined_call_operand.hbm [shape: f32[8,32], index: 1, kind: input, shape index: {}]
  %s2 = inlined_call_operand.hbm [shape: bf16[32,64], index: 2, kind: input, shape index: {}]
  %s3 = inlined_call_operand.hbm [shape: bf16[32,64], index: 3, kind: input, shape index: {}]
  %s4 = inlined_call_operand.vmem [shape: f32[1,64], index: 4, kind: input, shape index: {}]
  %s5 = inlined_call_operand.hbm [shape: f32[1,1,64], index: 5, kind: output, shape index: {}]
  %s6 = sld [smem:[#allocation0]]
  $region58: #{tpu_custom_call.1} parent=0
    _
  %s8 = ssub.s32 1, %s6
  %s9 = scalar_select 0, %s8, %s6
  $region1: #{tpu_custom_call.1} parent=0
    #allocation3 [shape = 'u8[4096]{0}', space=vmem, size = 0x1000, scoped, tag = 'input window, operand 0, single buffered']
    #allocation4 [shape = 's32[1]{0}', space=sflag, size = 0x4, scoped, tag = 'scoped memory for tpu_custom_call.1']
    #allocation5 [shape = 's32[1]{0}', space=sflag, size = 0x4, scoped, tag = 'scoped memory for tpu_custom_call.1']
    #allocation6 [shape = 'u8[4096]{0}', space=vmem, size = 0x1000, scoped, tag = 'input window, operand 1, single buffered']
    #allocation7 [shape = 's32[1]{0}', space=sflag, size = 0x4, scoped, tag = 'scoped memory for tpu_custom_call.1']
    #allocation8 [shape = 'u8[8192]{0}', space=vmem, size = 0x2000, scoped, tag = 'input window, operand 2, single buffered']
    #allocation9 [shape = 'u8[8192]{0}', space=vmem, size = 0x2000, scoped, tag = 'input window, operand 3, single buffered']
    #allocation10 [shape = 's32[1]{0}', space=sflag, size = 0x4, scoped, tag = 'scoped memory for tpu_custom_call.1']
    #allocation11 [shape = 'u8[512]{0}', space=vmem, size = 0x400, scoped, tag = 'output window, operand 0, single buffered']
    %10 = vsyncpa [#allocation4], 0
    %11 = vsyncpa [#allocation7], 0
    %12 = vsyncpa [#allocation10], 0
    %13 = vsyncpa [#allocation5], 0
    // Predicated region
    $region2: #{tpu_custom_call.1} parent=1 // pred_check
      _
    $region3: #{tpu_custom_call.1} parent=1 // pred_check_branch
      %15 = sbr.rel (0) target = $region5
    $region4: #{tpu_custom_call.1} parent=1 // pred_region
      %s16 = sadd.s32 0, 0
      %18 = vsyncadd [#allocation4], 0
      %s19 = smul.addr %s16, 8
      %s20 = scalar_lea.hbm %s0, %s19
      %s22 = sshll.u32 %s20, 4
      %s23 = int_to_ptr.hbm [resolvable:$true] %s22
      %s24 = sshll.u32 [#allocation3], 4
      %s25 = int_to_ptr.vmem [resolvable:$true] %s24
      %27 = dma.hbm_to_vmem [thread:$0]  %s23, 128, %s25, [#allocation4]
    $region5: #{tpu_custom_call.1} parent=1 // pred_fallthru
      _
    // Predicated region
    $region6: #{tpu_custom_call.1} parent=1 // pred_check
      _
    $region7: #{tpu_custom_call.1} parent=1 // pred_check_branch
      %29 = sbr.rel (0) target = $region9
    $region8: #{tpu_custom_call.1} parent=1 // pred_region
      %s30 = sadd.s32 0, 0
      %32 = vsyncadd [#allocation7], 0
      %s33 = smul.addr %s30, 8
      %s34 = scalar_lea.hbm %s1, %s33
      %s36 = sshll.u32 %s34, 4
      %s37 = int_to_ptr.hbm [resolvable:$true] %s36
      %s38 = sshll.u32 [#allocation6], 4
      %s39 = int_to_ptr.vmem [resolvable:$true] %s38
      %41 = dma.hbm_to_vmem [thread:$0]  %s37, 128, %s39, [#allocation7]
    $region9: #{tpu_custom_call.1} parent=1 // pred_fallthru
      _
    // Predicated region
    $region10: #{tpu_custom_call.1} parent=1 // pred_check
      _
    $region11: #{tpu_custom_call.1} parent=1 // pred_check_branch
      %43 = sbr.rel (0) target = $region13
    $region12: #{tpu_custom_call.1} parent=1 // pred_region
      %45 = vsyncadd [#allocation7], 0
      %s46 = sshll.u32 %s2, 4
      %s47 = int_to_ptr.hbm [resolvable:$true] %s46
      %s48 = sshll.u32 [#allocation8], 4
      %s49 = int_to_ptr.vmem [resolvable:$true] %s48
      %54 = dma.hbm_to_vmem [thread:$0]  %s47, 256, %s49, [#allocation7], 64, 64, 4
    $region13: #{tpu_custom_call.1} parent=1 // pred_fallthru
      _
    // Predicated region
    $region14: #{tpu_custom_call.1} parent=1 // pred_check
      _
    $region15: #{tpu_custom_call.1} parent=1 // pred_check_branch
      %56 = sbr.rel (0) target = $region17
    $region16: #{tpu_custom_call.1} parent=1 // pred_region
      %58 = vsyncadd [#allocation10], 0
      %s59 = sshll.u32 %s3, 4
      %s60 = int_to_ptr.hbm [resolvable:$true] %s59
      %s61 = sshll.u32 [#allocation9], 4
      %s62 = int_to_ptr.vmem [resolvable:$true] %s61
      %67 = dma.hbm_to_vmem [thread:$0]  %s60, 256, %s62, [#allocation10], 64, 64, 4
    $region17: #{tpu_custom_call.1} parent=1 // pred_fallthru
      _
    // Predicated region
    $region18: #{tpu_custom_call.1} parent=1 // pred_check
      _
    $region19: #{tpu_custom_call.1} parent=1 // pred_check_branch
      %69 = sbr.rel (0) target = $region21
    $region20: #{tpu_custom_call.1} parent=1 // pred_region
      _
    $region21: #{tpu_custom_call.1} parent=1 // pred_fallthru
      _
    // Predicated region
    $region22: #{tpu_custom_call.1} parent=1 // pred_check
      _
    $region23: #{tpu_custom_call.1} parent=1 // pred_check_branch
      %71 = sbr.rel (0) target = $region25
    $region24: #{tpu_custom_call.1} parent=1 // pred_region
      %73 = dma.done [#allocation4], 128
    $region25: #{tpu_custom_call.1} parent=1 // pred_fallthru
      _
    // Predicated region
    $region26: #{tpu_custom_call.1} parent=1 // pred_check
      _
    $region27: #{tpu_custom_call.1} parent=1 // pred_check_branch
      %75 = sbr.rel (0) target = $region29
    $region28: #{tpu_custom_call.1} parent=1 // pred_region
      %77 = dma.done [#allocation7], 128
    $region29: #{tpu_custom_call.1} parent=1 // pred_fallthru
      _
    // Predicated region
    $region30: #{tpu_custom_call.1} parent=1 // pred_check
      _
    $region31: #{tpu_custom_call.1} parent=1 // pred_check_branch
      %79 = sbr.rel (0) target = $region33
    $region32: #{tpu_custom_call.1} parent=1 // pred_region
      %81 = dma.done [#allocation7], 256
    $region33: #{tpu_custom_call.1} parent=1 // pred_fallthru
      _
    // Predicated region
    $region34: #{tpu_custom_call.1} parent=1 // pred_check
      _
    $region35: #{tpu_custom_call.1} parent=1 // pred_check_branch
      %83 = sbr.rel (0) target = $region37
    $region36: #{tpu_custom_call.1} parent=1 // pred_region
      %85 = dma.done [#allocation10], 256
    $region37: #{tpu_custom_call.1} parent=1 // pred_fallthru
      _
    %s86 = sadd.s32 0, 0
    %s87 = sadd.s32 0, 0
    %s89 = sadd.s32 0, 0
    %p90 = scmp.eq.s32.totalorder 0, 0
    // Predicated region
    $region38: #{tpu_custom_call.1} parent=1 // pred_check
      %p91 = pneg %p90
    $region39: #{tpu_custom_call.1} parent=1 // pred_check_branch
      %93 = sbr.rel (%p91) target = $region41
    $region40: #{tpu_custom_call.1} parent=1 // pred_region
      %vm94 = vcmask 523264
      %95 = vst.msk [vmem:[#allocation2] sm:$0xff] %vm94, 0.0
    $region41: #{tpu_custom_call.1} parent=1 // pred_fallthru
      _
    %p96 = scmp.lt.s32.totalorder %s89, 1
    // Predicated region
    $region42: #{tpu_custom_call.1} parent=1 // pred_check
      %p97 = pneg %p96
    $region43: #{tpu_custom_call.1} parent=1 // pred_check_branch
      %99 = sbr.rel (%p97) target = $region45
    $region44: #{tpu_custom_call.1} parent=1 // pred_region
      %v100 = vld [vmem:[#allocation3] sm:$0xff]
      %v101 = vpack.c.bf16 %v100, %v100
      %v102 = vld [vmem:[#allocation6] sm:$0xff]
      %v103 = vpack.c.bf16 %v102, %v102
      %v104 = vld [vmem:[#allocation8] sm:$0xf]
      %v105 = vld [vmem:[#allocation8 + $0x4] sm:$0xf]
      %v106 = vld [vmem:[#allocation8 + $0x8] sm:$0xf]
      %v107 = vld [vmem:[#allocation8 + $0xc] sm:$0xf]
      %v108 = vld [vmem:[#allocation9] sm:$0xf]
      %v109 = vld [vmem:[#allocation9 + $0x4] sm:$0xf]
      %v110 = vld [vmem:[#allocation9 + $0x8] sm:$0xf]
      %v111 = vld [vmem:[#allocation9 + $0xc] sm:$0xf]
      %v116 = vunpack.c.l.b16 %v108
      %v117 = vunpack.c.l.b16 %v109
      %v118 = vunpack.c.l.b16 %v110
      %v119 = vunpack.c.l.b16 %v111
      %v120 = vpack.c.b16 %v117, %v116
      %v121 = vpack.c.b16 %v119, %v118
      %vm124 = vcmask 261120
      %v126 = vsel %vm124, %v103, 0
      %128 = vmatpush.bf16.msra.mxu0 0
      %129 = vmatpush.bf16.msra.mxu0 0
      %130 = vmatpush.bf16.msra.mxu0 0
      %131 = vmatpush.bf16.msra.mxu0 0
      %132 = vmatpush.bf16.msra.mxu0 0
      %133 = vmatpush.bf16.msra.mxu0 0
      %134 = vmatpush.bf16.msra.mxu0 %v121
      %135 = vmatpush.bf16.msra.mxu0 %v120
      %136 = vmatmul.bf16.gmra.mxu0 %v126
      %v137 = vpop.f32.mrf.mxu0
      %v138 = vadd.f32 0.0, %v137
      %v139 = vpop.f32.mrf.mxu0
      %140 = vdwg.mxu0
      %v145 = vunpack.c.l.b16 %v104
      %v146 = vunpack.c.l.b16 %v105
      %v147 = vunpack.c.l.b16 %v106
      %v148 = vunpack.c.l.b16 %v107
      %v149 = vpack.c.b16 %v146, %v145
      %v150 = vpack.c.b16 %v148, %v147
      %v154 = vsel %vm124, %v101, 0
      %156 = vmatpush.bf16.msra.mxu0 0
      %157 = vmatpush.bf16.msra.mxu0 0
      %158 = vmatpush.bf16.msra.mxu0 0
      %159 = vmatpush.bf16.msra.mxu0 0
      %160 = vmatpush.bf16.msra.mxu0 0
      %161 = vmatpush.bf16.msra.mxu0 0
      %162 = vmatpush.bf16.msra.mxu0 %v150
      %163 = vmatpush.bf16.msra.mxu0 %v149
      %164 = vmatmul.bf16.gmra.mxu0 %v154
      %v165 = vpop.f32.mrf.mxu0
      %v166 = vadd.f32 %v138, %v165
      %v167 = vpop.f32.mrf.mxu0
      %168 = vdwg.mxu0
      %v169 = vld [vmem:[%s4] sm:$0x1]
      %v171 = vperm.slane %v169, 0
      %v173 = vadd.f32 %v166, %v171
      %v174 = vmax.f32 %v173, 0.0
      %v175 = vld [vmem:[#allocation2] sm:$0xff]
      %v176 = vadd.f32 %v174, 0.0
      %v177 = vadd.f32 %v175, %v176
      %vm178 = vcmask 523264
      %179 = vst.msk [vmem:[#allocation2] sm:$0xff] %vm178, %v177
    $region45: #{tpu_custom_call.1} parent=1 // pred_fallthru
      _
    // Predicated region
    $region46: #{tpu_custom_call.1} parent=1 // pred_check
      %p180 = pneg %p90
    $region47: #{tpu_custom_call.1} parent=1 // pred_check_branch
      %182 = sbr.rel (%p180) target = $region49
    $region48: #{tpu_custom_call.1} parent=1 // pred_region
      %v183 = vld [vmem:[#allocation2] sm:$0xff]
      %vm184 = vcmask 523264
      %v185 = vsel %vm184, %v183, 0.0
      %v186 = vrot.slane %v185, 4
      %v187 = vadd.f32 %v185, %v186
      %v188 = vrot.slane %v187, 2
      %v189 = vadd.f32 %v187, %v188
      %v190 = vrot.slane %v189, 1
      %v191 = vadd.f32 %v189, %v190
      %vm192 = vcmask 516096
      %193 = vst.msk [vmem:[#allocation11] sm:$0x1] %vm192, %v191
    $region49: #{tpu_custom_call.1} parent=1 // pred_fallthru
      _
    // Predicated region
    $region50: #{tpu_custom_call.1} parent=1 // pred_check
      _
    $region51: #{tpu_custom_call.1} parent=1 // pred_check_branch
      %195 = sbr.rel (0) target = $region53
    $region52: #{tpu_custom_call.1} parent=1 // pred_region
      %197 = vsyncadd [#allocation5], 0
      %s199 = sshll.u32 [#allocation11], 4
      %s200 = int_to_ptr.vmem [resolvable:$true] %s199
      %s201 = sshll.u32 %s5, 4
      %s202 = int_to_ptr.hbm [resolvable:$true] %s201
      %204 = dma.vmem_to_hbm [thread:$0]  %s200, 16, %s202, [#allocation5]
    $region53: #{tpu_custom_call.1} parent=1 // pred_fallthru
      _
    // Predicated region
    $region54: #{tpu_custom_call.1} parent=1 // pred_check
      _
    $region55: #{tpu_custom_call.1} parent=1 // pred_check_branch
      %206 = sbr.rel (0) target = $region57
    $region56: #{tpu_custom_call.1} parent=1 // pred_region
      %208 = dma.done [#allocation5], 16
    $region57: #{tpu_custom_call.1} parent=1 // pred_fallthru
      _
    %209 = vsyncpa [#allocation4], 1
    %210 = vsyncpa [#allocation7], 1
    %211 = vsyncpa [#allocation10], 1
    %212 = vsyncpa [#allocation5], 1

</llo_original>
